<compile_context>
chip_gen: v6e
topology: v6e:2x2x1
jax: 0.10.0
libtpu: 0.0.40
codegen_flags: <defaults>
</compile_context>

<pallas_src>
import functools

import jax
import jax.numpy as jnp
from jax.experimental import pallas as pl
from jax.experimental.pallas import tpu as pltpu

INPUT_SIZE = 28 * 28   # 784
NUM_CLASSES = 10
PADDED_CLASSES = 128   # lane-dense output width
MAX_TB = 1024          # batch tile (sweepable 512-2048)


def _round_up(n, m):
    return ((n + m - 1) // m) * m


def _linear_kernel(x_ref, w_ref, b_ref, o_ref):
    # x_ref: (TB, 784) bf16   w_ref: (784, 128) bf16
    # b_ref: (1, 128)  f32    o_ref: (TB, 128)  f32
    acc = jnp.dot(x_ref[...], w_ref[...], preferred_element_type=jnp.float32)
    o_ref[...] = acc + b_ref[...]


@functools.partial(jax.jit, static_argnames=())
def logistic_regression_forward(x, weight, bias):
    """Forward pass of Logistic_regression_MNIST.

    Args:
      x: any shape whose trailing dims flatten to 784 (e.g. (B, 1, 28, 28)).
      weight: (10, 784) float32  (PyTorch nn.Linear convention).
      bias:   (10,) float32.

    Returns:
      (B, 10) float32 logits.
    """
    x2d = x.reshape(-1, INPUT_SIZE)
    B = x2d.shape[0]

    # Batch tiling: TB multiple of 16 (bf16 sublane packing), pad B up to it.
    TB = min(MAX_TB, _round_up(B, 16))
    B_pad = _round_up(B, TB)
    if B_pad != B:
        x2d = jnp.pad(x2d, ((0, B_pad - B), (0, 0)))
    x_bf16 = x2d.astype(jnp.bfloat16)                              # (B_pad, 784)

    # Pre-transpose + zero-pad weight to lane-dense (784, 128) bf16.
    w_bf16 = jnp.pad(
        weight.astype(jnp.float32).T,
        ((0, 0), (0, PADDED_CLASSES - NUM_CLASSES)),
    ).astype(jnp.bfloat16)                                          # (784, 128)

    b2d = jnp.pad(
        bias.astype(jnp.float32),
        (0, PADDED_CLASSES - NUM_CLASSES),
    ).reshape(1, PADDED_CLASSES)                                    # (1, 128)

    grid = (B_pad // TB,)

    cost = pl.CostEstimate(
        flops=2 * B_pad * INPUT_SIZE * PADDED_CLASSES,
        transcendentals=0,
        bytes_accessed=(B_pad * INPUT_SIZE * 2             # x (bf16)
                        + INPUT_SIZE * PADDED_CLASSES * 2  # W (bf16)
                        + PADDED_CLASSES * 4               # bias (f32)
                        + B_pad * PADDED_CLASSES * 4),     # out (f32)
    )

    out_padded = pl.pallas_call(
        _linear_kernel,
        out_shape=jax.ShapeDtypeStruct((B_pad, PADDED_CLASSES), jnp.float32),
        grid_spec=pltpu.PrefetchScalarGridSpec(
            num_scalar_prefetch=0,
            grid=grid,
            in_specs=[
                pl.BlockSpec((TB, INPUT_SIZE), lambda i: (i, 0)),
                pl.BlockSpec((INPUT_SIZE, PADDED_CLASSES), lambda i: (0, 0)),
                pl.BlockSpec((1, PADDED_CLASSES), lambda i: (0, 0)),
            ],
            out_specs=pl.BlockSpec((TB, PADDED_CLASSES), lambda i: (i, 0)),
        ),
        compiler_params=pltpu.CompilerParams(
            dimension_semantics=("parallel",),
            vmem_limit_bytes=64 << 20,
        ),
        cost_estimate=cost,
    )(x_bf16, w_bf16, b2d)

    # Slice away batch padding and the zero-padded class lanes.
    return out_padded[:B, :NUM_CLASSES]


def init_params(key):
    """Deterministic init mimicking nn.Linear default (uniform +/- 1/sqrt(fan_in))."""
    kw, kb = jax.random.split(key)
    bound = 1.0 / jnp.sqrt(jnp.float32(INPUT_SIZE))
    weight = jax.random.uniform(kw, (NUM_CLASSES, INPUT_SIZE),
                                jnp.float32, -bound, bound)
    bias = jax.random.uniform(kb, (NUM_CLASSES,), jnp.float32, -bound, bound)
    return weight, bias


if __name__ == "__main__":
    key = jax.random.PRNGKey(0)
    k_x, k_p = jax.random.split(key)

    # Small MNIST-like batch: (B, 1, 28, 28), flattened to (B, 784) in forward.
    x = jax.random.normal(k_x, (2, 1, 28, 28), jnp.float32)
    weight, bias = init_params(k_p)

    out = logistic_regression_forward(x, weight, bias)
    out = jax.block_until_ready(out)

    # Reference in plain JAX with the same bf16 input quantization
    # (bf16 x bf16 products are exact in f32, so this should match tightly).
    x_q = x.reshape(-1, INPUT_SIZE).astype(jnp.bfloat16).astype(jnp.float32)
    w_q = weight.astype(jnp.bfloat16).astype(jnp.float32)
    ref = x_q @ w_q.T + bias

    assert out.shape == (2, NUM_CLASSES)
    assert jnp.allclose(out, ref, atol=1e-3, rtol=1e-3), (
        float(jnp.max(jnp.abs(out - ref))))

    print("KERNEL_OK")
</pallas_src>

<mosaic_0001>
module attributes {stable_mosaic.version = 11 : i64} {
  func.func @_linear_kernel(%arg0: i32, %arg1: memref<16x784xbf16, #tpu.memory_space<vmem>>, %arg2: memref<784x128xbf16, #tpu.memory_space<vmem>>, %arg3: memref<1x128xf32, #tpu.memory_space<vmem>>, %arg4: memref<16x128xf32, #tpu.memory_space<vmem>>) attributes {dimension_semantics = [#tpu.dimension_semantics<parallel>], iteration_bounds = array<i64: 1>, scalar_prefetch = 0 : i64, scratch_operands = 0 : i64, tpu.core_type = #tpu.core_type<tc>, window_params = [{transform_indices = @transform_0, window_bounds = array<i64: 16, 784>}, {pipeline_mode = #tpu.pipeline_mode<synchronous>, transform_indices = @transform_1, window_bounds = array<i64: 784, 128>}, {pipeline_mode = #tpu.pipeline_mode<synchronous>, transform_indices = @transform_2, window_bounds = array<i64: 1, 128>}, {transform_indices = @transform_3, window_bounds = array<i64: 16, 128>}]} {
    %c0 = arith.constant 0 : index
    %c0_0 = arith.constant 0 : index
    %0 = vector.load %arg1[%c0, %c0_0] : memref<16x784xbf16, #tpu.memory_space<vmem>>, vector<16x784xbf16>
    %c0_1 = arith.constant 0 : index
    %c0_2 = arith.constant 0 : index
    %1 = vector.load %arg2[%c0_1, %c0_2] : memref<784x128xbf16, #tpu.memory_space<vmem>>, vector<784x128xbf16>
    %cst = arith.constant dense<0.000000e+00> : vector<16x128xf32>
    %2 = tpu.matmul %0, %1, %cst {dimension_numbers = #tpu.dot_dimension_numbers<[1], [0], [0], [1], [0, 0, 1, 1], [], []>} : vector<16x784xbf16>, vector<784x128xbf16>, vector<16x128xf32> -> vector<16x128xf32>
    %c0_3 = arith.constant 0 : index
    %c0_4 = arith.constant 0 : index
    %3 = vector.load %arg3[%c0_3, %c0_4] : memref<1x128xf32, #tpu.memory_space<vmem>>, vector<1x128xf32>
    %4 = vector.broadcast %3 : vector<1x128xf32> to vector<16x128xf32>
    %5 = arith.addf %2, %4 : vector<16x128xf32>
    %c0_5 = arith.constant 0 : index
    %c0_6 = arith.constant 0 : index
    %6 = vector.load %arg4[%c0_5, %c0_6] : memref<16x128xf32, #tpu.memory_space<vmem>>, vector<16x128xf32>
    tpu.vector_store %arg4[%c0_5, %c0_6], %5 {strides = array<i32>} : memref<16x128xf32, #tpu.memory_space<vmem>>, vector<16x128xf32>,
    return
  }
  func.func @transform_0(%arg0: i32) -> (i32, i32) {
    %c0_i32 = arith.constant 0 : i32
    %c0_i32_0 = arith.constant 0 : i32
    return %arg0, %c0_i32 : i32, i32
  }
  func.func @transform_1(%arg0: i32) -> (i32, i32) {
    %c0_i32 = arith.constant 0 : i32
    %c0_i32_0 = arith.constant 0 : i32
    %c0_i32_1 = arith.constant 0 : i32
    return %c0_i32, %c0_i32_0 : i32, i32
  }
  func.func @transform_2(%arg0: i32) -> (i32, i32) {
    %c0_i32 = arith.constant 0 : i32
    %c0_i32_0 = arith.constant 0 : i32
    %c0_i32_1 = arith.constant 0 : i32
    return %c0_i32, %c0_i32_0 : i32, i32
  }
  func.func @transform_3(%arg0: i32) -> (i32, i32) {
    %c0_i32 = arith.constant 0 : i32
    %c0_i32_0 = arith.constant 0 : i32
    return %arg0, %c0_i32 : i32, i32
  }
}

</mosaic_0001>

<llo_original>
// kernel: logistic_regression_forward.1
$region0: #{logistic_regression_forward.1}
  #allocation0 [shape = 'u32[]', space=smem, size = 0x4, offset = 0x4, fixed_abs, tag = 'smem constant byte address 0x4 - core index']
  #allocation1 [shape = 'u32[144,128]{1,0:T(1,128)}', space=vmem, size = 0x12000, scoped, tag = 'internal scratch']
  %s0 = inlined_call_operand.vmem [shape: bf16[16,784], index: 0, kind: input, shape index: {}]
  %s1 = inlined_call_operand.vmem [shape: bf16[784,128], index: 1, kind: input, shape index: {}]
  %s2 = inlined_call_operand.vmem [shape: f32[1,128], index: 2, kind: input, shape index: {}]
  %s3 = inlined_call_operand.vmem [shape: f32[16,128], index: 3, kind: output, shape index: {}]
  %s4 = sld [smem:[#allocation0]]
  $region22: #{logistic_regression_forward.1} parent=0
    _
  %s6 = ssub.s32 1, %s4
  %s7 = scalar_select 0, %s6, %s4
  // Predicated region
  $region2: #{logistic_regression_forward.1} parent=0 // pred_check
    _
  $region3: #{logistic_regression_forward.1} parent=0 // pred_check_branch
    %9 = sbr.rel (0) target = $region5
  $region4: #{logistic_regression_forward.1} parent=0 // pred_region
    _
  $region5: #{logistic_regression_forward.1} parent=0 // pred_fallthru
    _
  // Predicated region
  $region6: #{logistic_regression_forward.1} parent=0 // pred_check
    _
  $region7: #{logistic_regression_forward.1} parent=0 // pred_check_branch
    %11 = sbr.rel (0) target = $region9
  $region8: #{logistic_regression_forward.1} parent=0 // pred_region
    _
  $region9: #{logistic_regression_forward.1} parent=0 // pred_fallthru
    _
  // Predicated region
  $region10: #{logistic_regression_forward.1} parent=0 // pred_check
    _
  $region11: #{logistic_regression_forward.1} parent=0 // pred_check_branch
    %13 = sbr.rel (0) target = $region13
  $region12: #{logistic_regression_forward.1} parent=0 // pred_region
    _
  $region13: #{logistic_regression_forward.1} parent=0 // pred_fallthru
    _
  %v15 = vld [vmem:[%s0] sm:$0xff]
  %v16 = vld [vmem:[%s0 + $0x8] sm:$0xff]
  %v17 = vld [vmem:[%s0 + $0x10] sm:$0xff]
  %v18 = vld [vmem:[%s0 + $0x18] sm:$0xf]
  %v19 = vld [vmem:[%s0 + $0x1c] sm:$0xff]
  %v20 = vld [vmem:[%s0 + $0x24] sm:$0xff]
  %v21 = vld [vmem:[%s0 + $0x2c] sm:$0xff]
  %v22 = vld [vmem:[%s0 + $0x34] sm:$0xf]
  %v23 = vld [vmem:[%s1] sm:$0xf]
  %v24 = vld [vmem:[%s1 + $0x4] sm:$0xf]
  %v25 = vld [vmem:[%s1 + $0x8] sm:$0xf]
  %v26 = vld [vmem:[%s1 + $0xc] sm:$0xf]
  %v27 = vld [vmem:[%s1 + $0x10] sm:$0xf]
  %v28 = vld [vmem:[%s1 + $0x14] sm:$0xf]
  %v29 = vld [vmem:[%s1 + $0x18] sm:$0xf]
  %v30 = vld [vmem:[%s1 + $0x1c] sm:$0xf]
  %v31 = vld [vmem:[%s1 + $0x20] sm:$0xf]
  %v32 = vld [vmem:[%s1 + $0x24] sm:$0xf]
  %v33 = vld [vmem:[%s1 + $0x28] sm:$0xf]
  %v34 = vld [vmem:[%s1 + $0x2c] sm:$0xf]
  %v35 = vld [vmem:[%s1 + $0x30] sm:$0xf]
  %v36 = vld [vmem:[%s1 + $0x34] sm:$0xf]
  %v37 = vld [vmem:[%s1 + $0x38] sm:$0xf]
  %v38 = vld [vmem:[%s1 + $0x3c] sm:$0xf]
  %v39 = vld [vmem:[%s1 + $0x40] sm:$0xf]
  %v40 = vld [vmem:[%s1 + $0x44] sm:$0xf]
  %v41 = vld [vmem:[%s1 + $0x48] sm:$0xf]
  %v42 = vld [vmem:[%s1 + $0x4c] sm:$0xf]
  %v43 = vld [vmem:[%s1 + $0x50] sm:$0xf]
  %v44 = vld [vmem:[%s1 + $0x54] sm:$0xf]
  %v45 = vld [vmem:[%s1 + $0x58] sm:$0xf]
  %v46 = vld [vmem:[%s1 + $0x5c] sm:$0xf]
  %v47 = vld [vmem:[%s1 + $0x60] sm:$0xf]
  %v48 = vld [vmem:[%s1 + $0x64] sm:$0xf]
  %v49 = vld [vmem:[%s1 + $0x68] sm:$0xf]
  %v50 = vld [vmem:[%s1 + $0x6c] sm:$0xf]
  %v51 = vld [vmem:[%s1 + $0x70] sm:$0xf]
  %v52 = vld [vmem:[%s1 + $0x74] sm:$0xf]
  %v53 = vld [vmem:[%s1 + $0x78] sm:$0xf]
  %v54 = vld [vmem:[%s1 + $0x7c] sm:$0xf]
  %v55 = vld [vmem:[%s1 + $0x80] sm:$0xf]
  %v56 = vld [vmem:[%s1 + $0x84] sm:$0xf]
  %v57 = vld [vmem:[%s1 + $0x88] sm:$0xf]
  %v58 = vld [vmem:[%s1 + $0x8c] sm:$0xf]
  %v59 = vld [vmem:[%s1 + $0x90] sm:$0xf]
  %v60 = vld [vmem:[%s1 + $0x94] sm:$0xf]
  %v61 = vld [vmem:[%s1 + $0x98] sm:$0xf]
  %v62 = vld [vmem:[%s1 + $0x9c] sm:$0xf]
  %v63 = vld [vmem:[%s1 + $0xa0] sm:$0xf]
  %v64 = vld [vmem:[%s1 + $0xa4] sm:$0xf]
  %v65 = vld [vmem:[%s1 + $0xa8] sm:$0xf]
  %v66 = vld [vmem:[%s1 + $0xac] sm:$0xf]
  %v67 = vld [vmem:[%s1 + $0xb0] sm:$0xf]
  %v68 = vld [vmem:[%s1 + $0xb4] sm:$0xf]
  %v69 = vld [vmem:[%s1 + $0xb8] sm:$0xf]
  %v70 = vld [vmem:[%s1 + $0xbc] sm:$0xf]
  %v71 = vld [vmem:[%s1 + $0xc0] sm:$0xf]
  %v72 = vld [vmem:[%s1 + $0xc4] sm:$0xf]
  %v73 = vld [vmem:[%s1 + $0xc8] sm:$0xf]
  %v74 = vld [vmem:[%s1 + $0xcc] sm:$0xf]
  %v75 = vld [vmem:[%s1 + $0xd0] sm:$0xf]
  %v76 = vld [vmem:[%s1 + $0xd4] sm:$0xf]
  %v77 = vld [vmem:[%s1 + $0xd8] sm:$0xf]
  %v78 = vld [vmem:[%s1 + $0xdc] sm:$0xf]
  %v79 = vld [vmem:[%s1 + $0xe0] sm:$0xf]
  %v80 = vld [vmem:[%s1 + $0xe4] sm:$0xf]
  %v81 = vld [vmem:[%s1 + $0xe8] sm:$0xf]
  %v82 = vld [vmem:[%s1 + $0xec] sm:$0xf]
  %v83 = vld [vmem:[%s1 + $0xf0] sm:$0xf]
  %v84 = vld [vmem:[%s1 + $0xf4] sm:$0xf]
  %v85 = vld [vmem:[%s1 + $0xf8] sm:$0xf]
  %v86 = vld [vmem:[%s1 + $0xfc] sm:$0xf]
  %v87 = vld [vmem:[%s1 + $0x100] sm:$0xf]
  %v88 = vld [vmem:[%s1 + $0x104] sm:$0xf]
  %v89 = vld [vmem:[%s1 + $0x108] sm:$0xf]
  %v90 = vld [vmem:[%s1 + $0x10c] sm:$0xf]
  %v91 = vld [vmem:[%s1 + $0x110] sm:$0xf]
  %v92 = vld [vmem:[%s1 + $0x114] sm:$0xf]
  %v93 = vld [vmem:[%s1 + $0x118] sm:$0xf]
  %v94 = vld [vmem:[%s1 + $0x11c] sm:$0xf]
  %v95 = vld [vmem:[%s1 + $0x120] sm:$0xf]
  %v96 = vld [vmem:[%s1 + $0x124] sm:$0xf]
  %v97 = vld [vmem:[%s1 + $0x128] sm:$0xf]
  %v98 = vld [vmem:[%s1 + $0x12c] sm:$0xf]
  %v99 = vld [vmem:[%s1 + $0x130] sm:$0xf]
  %v100 = vld [vmem:[%s1 + $0x134] sm:$0xf]
  %v101 = vld [vmem:[%s1 + $0x138] sm:$0xf]
  %v102 = vld [vmem:[%s1 + $0x13c] sm:$0xf]
  %v103 = vld [vmem:[%s1 + $0x140] sm:$0xf]
  %v104 = vld [vmem:[%s1 + $0x144] sm:$0xf]
  %v105 = vld [vmem:[%s1 + $0x148] sm:$0xf]
  %v106 = vld [vmem:[%s1 + $0x14c] sm:$0xf]
  %v107 = vld [vmem:[%s1 + $0x150] sm:$0xf]
  %v108 = vld [vmem:[%s1 + $0x154] sm:$0xf]
  %v109 = vld [vmem:[%s1 + $0x158] sm:$0xf]
  %v110 = vld [vmem:[%s1 + $0x15c] sm:$0xf]
  %v111 = vld [vmem:[%s1 + $0x160] sm:$0xf]
  %v112 = vld [vmem:[%s1 + $0x164] sm:$0xf]
  %v113 = vld [vmem:[%s1 + $0x168] sm:$0xf]
  %v114 = vld [vmem:[%s1 + $0x16c] sm:$0xf]
  %v115 = vld [vmem:[%s1 + $0x170] sm:$0xf]
  %v116 = vld [vmem:[%s1 + $0x174] sm:$0xf]
  %v117 = vld [vmem:[%s1 + $0x178] sm:$0xf]
  %v118 = vld [vmem:[%s1 + $0x17c] sm:$0xf]
  %v119 = vld [vmem:[%s1 + $0x180] sm:$0xf]
  %v120 = vld [vmem:[%s1 + $0x184] sm:$0xf]
  %v121 = vld [vmem:[%s2] sm:$0x1]
  %v123 = vlaneseq
  %v124 = vshrl.u32 %v123, 7
  %v125 = vsub.s32 0, %v124
  %v126 = vrot.slane %v121, %v125
  %v136 = vunpack.c.l.b16 %v15
  %v137 = vunpack.c.h.b16 %v15
  %v138 = vunpack.c.l.b16 %v16
  %v139 = vunpack.c.h.b16 %v16
  %v140 = vunpack.c.l.b16 %v17
  %v141 = vunpack.c.h.b16 %v17
  %v142 = vunpack.c.l.b16 %v18
  %v143 = vunpack.c.l.b16 %v19
  %v144 = vunpack.c.h.b16 %v19
  %v145 = vunpack.c.l.b16 %v20
  %v146 = vunpack.c.h.b16 %v20
  %v147 = vunpack.c.l.b16 %v21
  %v148 = vunpack.c.h.b16 %v21
  %v149 = vunpack.c.l.b16 %v22
  %v150 = vpack.c.b16 %v143, %v136
  %v151 = vpack.c.b16 %v144, %v137
  %v152 = vpack.c.b16 %v145, %v138
  %v153 = vpack.c.b16 %v146, %v139
  %v154 = vpack.c.b16 %v147, %v140
  %v155 = vpack.c.b16 %v148, %v141
  %v156 = vpack.c.b16 %v149, %v142
  %v261 = vunpack.c.l.b16 %v23
  %v262 = vunpack.c.l.b16 %v24
  %v263 = vunpack.c.l.b16 %v25
  %v264 = vunpack.c.l.b16 %v26
  %v265 = vunpack.c.l.b16 %v27
  %v266 = vunpack.c.l.b16 %v28
  %v267 = vunpack.c.l.b16 %v29
  %v268 = vunpack.c.l.b16 %v30
  %v269 = vunpack.c.l.b16 %v31
  %v270 = vunpack.c.l.b16 %v32
  %v271 = vunpack.c.l.b16 %v33
  %v272 = vunpack.c.l.b16 %v34
  %v273 = vunpack.c.l.b16 %v35
  %v274 = vunpack.c.l.b16 %v36
  %v275 = vunpack.c.l.b16 %v37
  %v276 = vunpack.c.l.b16 %v38
  %v277 = vunpack.c.l.b16 %v39
  %v278 = vunpack.c.l.b16 %v40
  %v279 = vunpack.c.l.b16 %v41
  %v280 = vunpack.c.l.b16 %v42
  %v281 = vunpack.c.l.b16 %v43
  %v282 = vunpack.c.l.b16 %v44
  %v283 = vunpack.c.l.b16 %v45
  %v284 = vunpack.c.l.b16 %v46
  %v285 = vunpack.c.l.b16 %v47
  %v286 = vunpack.c.l.b16 %v48
  %v287 = vunpack.c.l.b16 %v49
  %v288 = vunpack.c.l.b16 %v50
  %v289 = vunpack.c.l.b16 %v51
  %v290 = vunpack.c.l.b16 %v52
  %v291 = vunpack.c.l.b16 %v53
  %v292 = vunpack.c.l.b16 %v54
  %v293 = vunpack.c.l.b16 %v55
  %v294 = vunpack.c.l.b16 %v56
  %v295 = vunpack.c.l.b16 %v57
  %v296 = vunpack.c.l.b16 %v58
  %v297 = vunpack.c.l.b16 %v59
  %v298 = vunpack.c.l.b16 %v60
  %v299 = vunpack.c.l.b16 %v61
  %v300 = vunpack.c.l.b16 %v62
  %v301 = vunpack.c.l.b16 %v63
  %v302 = vunpack.c.l.b16 %v64
  %v303 = vunpack.c.l.b16 %v65
  %v304 = vunpack.c.l.b16 %v66
  %v305 = vunpack.c.l.b16 %v67
  %v306 = vunpack.c.l.b16 %v68
  %v307 = vunpack.c.l.b16 %v69
  %v308 = vunpack.c.l.b16 %v70
  %v309 = vunpack.c.l.b16 %v71
  %v310 = vunpack.c.l.b16 %v72
  %v311 = vunpack.c.l.b16 %v73
  %v312 = vunpack.c.l.b16 %v74
  %v313 = vunpack.c.l.b16 %v75
  %v314 = vunpack.c.l.b16 %v76
  %v315 = vunpack.c.l.b16 %v77
  %v316 = vunpack.c.l.b16 %v78
  %v317 = vunpack.c.l.b16 %v79
  %v318 = vunpack.c.l.b16 %v80
  %v319 = vunpack.c.l.b16 %v81
  %v320 = vunpack.c.l.b16 %v82
  %v321 = vunpack.c.l.b16 %v83
  %v322 = vunpack.c.l.b16 %v84
  %v323 = vunpack.c.l.b16 %v85
  %v324 = vunpack.c.l.b16 %v86
  %v325 = vunpack.c.l.b16 %v87
  %v326 = vunpack.c.l.b16 %v88
  %v327 = vunpack.c.l.b16 %v89
  %v328 = vunpack.c.l.b16 %v90
  %v329 = vunpack.c.l.b16 %v91
  %v330 = vunpack.c.l.b16 %v92
  %v331 = vunpack.c.l.b16 %v93
  %v332 = vunpack.c.l.b16 %v94
  %v333 = vunpack.c.l.b16 %v95
  %v334 = vunpack.c.l.b16 %v96
  %v335 = vunpack.c.l.b16 %v97
  %v336 = vunpack.c.l.b16 %v98
  %v337 = vunpack.c.l.b16 %v99
  %v338 = vunpack.c.l.b16 %v100
  %v339 = vunpack.c.l.b16 %v101
  %v340 = vunpack.c.l.b16 %v102
  %v341 = vunpack.c.l.b16 %v103
  %v342 = vunpack.c.l.b16 %v104
  %v343 = vunpack.c.l.b16 %v105
  %v344 = vunpack.c.l.b16 %v106
  %v345 = vunpack.c.l.b16 %v107
  %v346 = vunpack.c.l.b16 %v108
  %v347 = vunpack.c.l.b16 %v109
  %v348 = vunpack.c.l.b16 %v110
  %v349 = vunpack.c.l.b16 %v111
  %v350 = vunpack.c.l.b16 %v112
  %v351 = vunpack.c.l.b16 %v113
  %v352 = vunpack.c.l.b16 %v114
  %v353 = vunpack.c.l.b16 %v115
  %v354 = vunpack.c.l.b16 %v116
  %v355 = vunpack.c.l.b16 %v117
  %v356 = vunpack.c.l.b16 %v118
  %v357 = vunpack.c.l.b16 %v119
  %v358 = vunpack.c.l.b16 %v120
  %v359 = vpack.c.b16 %v262, %v261
  %v360 = vpack.c.b16 %v264, %v263
  %v361 = vpack.c.b16 %v266, %v265
  %v362 = vpack.c.b16 %v268, %v267
  %v363 = vpack.c.b16 %v270, %v269
  %v364 = vpack.c.b16 %v272, %v271
  %v365 = vpack.c.b16 %v274, %v273
  %v366 = vpack.c.b16 %v276, %v275
  %v367 = vpack.c.b16 %v278, %v277
  %v368 = vpack.c.b16 %v280, %v279
  %v369 = vpack.c.b16 %v282, %v281
  %v370 = vpack.c.b16 %v284, %v283
  %v371 = vpack.c.b16 %v286, %v285
  %v372 = vpack.c.b16 %v288, %v287
  %v373 = vpack.c.b16 %v290, %v289
  %v374 = vpack.c.b16 %v292, %v291
  %v375 = vpack.c.b16 %v294, %v293
  %v376 = vpack.c.b16 %v296, %v295
  %v377 = vpack.c.b16 %v298, %v297
  %v378 = vpack.c.b16 %v300, %v299
  %v379 = vpack.c.b16 %v302, %v301
  %v380 = vpack.c.b16 %v304, %v303
  %v381 = vpack.c.b16 %v306, %v305
  %v382 = vpack.c.b16 %v308, %v307
  %v383 = vpack.c.b16 %v310, %v309
  %v384 = vpack.c.b16 %v312, %v311
  %v385 = vpack.c.b16 %v314, %v313
  %v386 = vpack.c.b16 %v316, %v315
  %v387 = vpack.c.b16 %v318, %v317
  %v388 = vpack.c.b16 %v320, %v319
  %v389 = vpack.c.b16 %v322, %v321
  %v390 = vpack.c.b16 %v324, %v323
  %v391 = vpack.c.b16 %v326, %v325
  %v392 = vpack.c.b16 %v328, %v327
  %v393 = vpack.c.b16 %v330, %v329
  %v394 = vpack.c.b16 %v332, %v331
  %v395 = vpack.c.b16 %v334, %v333
  %v396 = vpack.c.b16 %v336, %v335
  %v397 = vpack.c.b16 %v338, %v337
  %v398 = vpack.c.b16 %v340, %v339
  %v399 = vpack.c.b16 %v342, %v341
  %v400 = vpack.c.b16 %v344, %v343
  %v401 = vpack.c.b16 %v346, %v345
  %v402 = vpack.c.b16 %v348, %v347
  %v403 = vpack.c.b16 %v350, %v349
  %v404 = vpack.c.b16 %v352, %v351
  %v405 = vpack.c.b16 %v354, %v353
  %v406 = vpack.c.b16 %v356, %v355
  %v407 = vpack.c.b16 %v358, %v357
  %vm457 = vcmask 130048
  %v459 = vsel %vm457, %v156, 0
  %461 = vmatprep.subr.bf16.mxu0 0
  %462 = vmatpush1.bf16.msra.mxu0 %v366
  %463 = vmatprep.subr.bf16.mxu0 0
  %464 = vmatpush1.bf16.msra.mxu0 %v365
  %465 = vmatprep.subr.bf16.mxu0 0
  %466 = vmatpush1.bf16.msra.mxu0 %v364
  %467 = vmatprep.subr.bf16.mxu0 0
  %468 = vmatpush1.bf16.msra.mxu0 %v363
  %469 = vmatprep.subr.bf16.mxu0 0
  %470 = vmatpush1.bf16.msra.mxu0 %v362
  %471 = vmatprep.subr.bf16.mxu0 0
  %472 = vmatpush1.bf16.msra.mxu0 %v361
  %473 = vmatprep.subr.bf16.mxu0 0
  %474 = vmatpush1.bf16.msra.mxu0 %v360
  %475 = vmatprep.subr.bf16.mxu0 0
  %476 = vmatpush1.bf16.msra.mxu0 %v359
  %477 = vmatprep.subr.bf16.mxu0 0
  %478 = vmatpush2.bf16.msra.mxu0 %v374
  %479 = vmatprep.subr.bf16.mxu0 0
  %480 = vmatpush2.bf16.msra.mxu0 %v373
  %481 = vmatprep.subr.bf16.mxu0 0
  %482 = vmatpush2.bf16.msra.mxu0 %v372
  %483 = vmatprep.subr.bf16.mxu0 0
  %484 = vmatpush2.bf16.msra.mxu0 %v371
  %485 = vmatprep.subr.bf16.mxu0 0
  %486 = vmatpush2.bf16.msra.mxu0 %v370
  %487 = vmatprep.subr.bf16.mxu0 0
  %488 = vmatpush2.bf16.msra.mxu0 %v369
  %489 = vmatprep.subr.bf16.mxu0 0
  %490 = vmatpush2.bf16.msra.mxu0 %v368
  %491 = vmatprep.subr.bf16.mxu0 0
  %492 = vmatpush2.bf16.msra.mxu0 %v367
  %493 = vmatprep.mubr.bf16.mxu0 %v151
  %494 = vmatmul.mubr.bf16.gmra.mxu0 %v150
  %v495 = vpop.f32.mrf.mxu0
  %v496 = vadd.f32 %v126, %v495
  %v497 = vpop.f32.mrf.mxu0
  %v498 = vpop.f32.mrf.mxu0
  %v499 = vadd.f32 %v126, %v498
  %v500 = vpop.f32.mrf.mxu0
  %501 = vdwg.mxu0
  %502 = vmatprep.subr.bf16.mxu0 0
  %503 = vmatpush1.bf16.msra.mxu0 %v382
  %504 = vmatprep.subr.bf16.mxu0 0
  %505 = vmatpush1.bf16.msra.mxu0 %v381
  %506 = vmatprep.subr.bf16.mxu0 0
  %507 = vmatpush1.bf16.msra.mxu0 %v380
  %508 = vmatprep.subr.bf16.mxu0 0
  %509 = vmatpush1.bf16.msra.mxu0 %v379
  %510 = vmatprep.subr.bf16.mxu0 0
  %511 = vmatpush1.bf16.msra.mxu0 %v378
  %512 = vmatprep.subr.bf16.mxu0 0
  %513 = vmatpush1.bf16.msra.mxu0 %v377
  %514 = vmatprep.subr.bf16.mxu0 0
  %515 = vmatpush1.bf16.msra.mxu0 %v376
  %516 = vmatprep.subr.bf16.mxu0 0
  %517 = vmatpush1.bf16.msra.mxu0 %v375
  %518 = vmatprep.subr.bf16.mxu0 0
  %519 = vmatpush2.bf16.msra.mxu0 %v390
  %520 = vmatprep.subr.bf16.mxu0 0
  %521 = vmatpush2.bf16.msra.mxu0 %v389
  %522 = vmatprep.subr.bf16.mxu0 0
  %523 = vmatpush2.bf16.msra.mxu0 %v388
  %524 = vmatprep.subr.bf16.mxu0 0
  %525 = vmatpush2.bf16.msra.mxu0 %v387
  %526 = vmatprep.subr.bf16.mxu0 0
  %527 = vmatpush2.bf16.msra.mxu0 %v386
  %528 = vmatprep.subr.bf16.mxu0 0
  %529 = vmatpush2.bf16.msra.mxu0 %v385
  %530 = vmatprep.subr.bf16.mxu0 0
  %531 = vmatpush2.bf16.msra.mxu0 %v384
  %532 = vmatprep.subr.bf16.mxu0 0
  %533 = vmatpush2.bf16.msra.mxu0 %v383
  %534 = vmatprep.mubr.bf16.mxu0 %v153
  %535 = vmatmul.mubr.bf16.gmra.mxu0 %v152
  %v536 = vpop.f32.mrf.mxu0
  %v537 = vadd.f32 %v496, %v536
  %v538 = vpop.f32.mrf.mxu0
  %v539 = vpop.f32.mrf.mxu0
  %v540 = vadd.f32 %v499, %v539
  %v541 = vpop.f32.mrf.mxu0
  %542 = vdwg.mxu0
  %543 = vmatprep.subr.bf16.mxu0 0
  %544 = vmatpush1.bf16.msra.mxu0 %v398
  %545 = vmatprep.subr.bf16.mxu0 0
  %546 = vmatpush1.bf16.msra.mxu0 %v397
  %547 = vmatprep.subr.bf16.mxu0 0
  %548 = vmatpush1.bf16.msra.mxu0 %v396
  %549 = vmatprep.subr.bf16.mxu0 0
  %550 = vmatpush1.bf16.msra.mxu0 %v395
  %551 = vmatprep.subr.bf16.mxu0 0
  %552 = vmatpush1.bf16.msra.mxu0 %v394
  %553 = vmatprep.subr.bf16.mxu0 0
  %554 = vmatpush1.bf16.msra.mxu0 %v393
  %555 = vmatprep.subr.bf16.mxu0 0
  %556 = vmatpush1.bf16.msra.mxu0 %v392
  %557 = vmatprep.subr.bf16.mxu0 0
  %558 = vmatpush1.bf16.msra.mxu0 %v391
  %559 = vmatprep.subr.bf16.mxu0 0
  %560 = vmatpush2.bf16.msra.mxu0 %v406
  %561 = vmatprep.subr.bf16.mxu0 0
  %562 = vmatpush2.bf16.msra.mxu0 %v405
  %563 = vmatprep.subr.bf16.mxu0 0
  %564 = vmatpush2.bf16.msra.mxu0 %v404
  %565 = vmatprep.subr.bf16.mxu0 0
  %566 = vmatpush2.bf16.msra.mxu0 %v403
  %567 = vmatprep.subr.bf16.mxu0 0
  %568 = vmatpush2.bf16.msra.mxu0 %v402
  %569 = vmatprep.subr.bf16.mxu0 0
  %570 = vmatpush2.bf16.msra.mxu0 %v401
  %571 = vmatprep.subr.bf16.mxu0 0
  %572 = vmatpush2.bf16.msra.mxu0 %v400
  %573 = vmatprep.subr.bf16.mxu0 0
  %574 = vmatpush2.bf16.msra.mxu0 %v399
  %575 = vmatprep.mubr.bf16.mxu0 %v155
  %576 = vmatmul.mubr.bf16.gmra.mxu0 %v154
  %v577 = vpop.f32.mrf.mxu0
  %v578 = vadd.f32 %v537, %v577
  %v579 = vpop.f32.mrf.mxu0
  %v580 = vpop.f32.mrf.mxu0
  %v581 = vadd.f32 %v540, %v580
  %v582 = vpop.f32.mrf.mxu0
  %583 = vdwg.mxu0
  %584 = vmatprep.subr.bf16.mxu0 0
  %585 = vmatpush1.bf16.msra.mxu0 0
  %586 = vmatprep.subr.bf16.mxu0 0
  %587 = vmatpush1.bf16.msra.mxu0 0
  %588 = vmatprep.subr.bf16.mxu0 0
  %589 = vmatpush1.bf16.msra.mxu0 0
  %590 = vmatprep.subr.bf16.mxu0 0
  %591 = vmatpush1.bf16.msra.mxu0 0
  %592 = vmatprep.subr.bf16.mxu0 0
  %593 = vmatpush1.bf16.msra.mxu0 0
  %594 = vmatprep.subr.bf16.mxu0 0
  %595 = vmatpush1.bf16.msra.mxu0 0
  %596 = vmatprep.subr.bf16.mxu0 0
  %597 = vmatpush1.bf16.msra.mxu0 0
  %598 = vmatprep.subr.bf16.mxu0 0
  %599 = vmatpush1.bf16.msra.mxu0 %v407
  %600 = vmatprep.subr.bf16.mxu0 0
  %601 = vmatpush2.bf16.msra.mxu0 0
  %602 = vmatprep.subr.bf16.mxu0 0
  %603 = vmatpush2.bf16.msra.mxu0 0
  %604 = vmatprep.subr.bf16.mxu0 0
  %605 = vmatpush2.bf16.msra.mxu0 0
  %606 = vmatprep.subr.bf16.mxu0 0
  %607 = vmatpush2.bf16.msra.mxu0 0
  %608 = vmatprep.subr.bf16.mxu0 0
  %609 = vmatpush2.bf16.msra.mxu0 0
  %610 = vmatprep.subr.bf16.mxu0 0
  %611 = vmatpush2.bf16.msra.mxu0 0
  %612 = vmatprep.subr.bf16.mxu0 0
  %613 = vmatpush2.bf16.msra.mxu0 0
  %614 = vmatprep.subr.bf16.mxu0 0
  %615 = vmatpush2.bf16.msra.mxu0 0
  %616 = vmatprep.mubr.bf16.mxu0 0
  %617 = vmatmul.mubr.bf16.gmra.mxu0 %v459
  %v618 = vpop.f32.mrf.mxu0
  %v619 = vadd.f32 %v578, %v618
  %v620 = vpop.f32.mrf.mxu0
  %v621 = vpop.f32.mrf.mxu0
  %v622 = vadd.f32 %v581, %v621
  %v623 = vpop.f32.mrf.mxu0
  %624 = vdwg.mxu0
  %625 = vst [vmem:[%s3] sm:$0xff] %v619
  %626 = vst [vmem:[%s3 + $0x8] sm:$0xff] %v622
  // Predicated region
  $region14: #{logistic_regression_forward.1} parent=0 // pred_check
    _
  $region15: #{logistic_regression_forward.1} parent=0 // pred_check_branch
    %628 = sbr.rel (0) target = $region17
  $region16: #{logistic_regression_forward.1} parent=0 // pred_region
    _
  $region17: #{logistic_regression_forward.1} parent=0 // pred_fallthru
    _
  // Predicated region
  $region18: #{logistic_regression_forward.1} parent=0 // pred_check
    _
  $region19: #{logistic_regression_forward.1} parent=0 // pred_check_branch
    %630 = sbr.rel (0) target = $region21
  $region20: #{logistic_regression_forward.1} parent=0 // pred_region
    _
  $region21: #{logistic_regression_forward.1} parent=0 // pred_fallthru
    _

</llo_original>
